<compile_context>
chip_gen: v7x
topology: tpu7x:2x2x1
jax: 0.10.0
libtpu: 0.0.40
codegen_flags: <defaults>
</compile_context>

<pallas_src>
import functools

import jax
import jax.numpy as jnp
from jax import lax
from jax.experimental import pallas as pl
from jax.experimental.pallas import tpu as pltpu


# ---------------------------------------------------------------------------
# Tile-size heuristics
# ---------------------------------------------------------------------------
_MAX_TN = 512
_MAX_TK = 2048
_BN_EPS = 1e-5


def _round_up(x, m):
    return (x + m - 1) // m * m


def _pick_tk(Kp):
    """Largest tk <= _MAX_TK that divides Kp (Kp is a multiple of 128)."""
    kb = Kp // 128
    best = 1
    for d in range(1, kb + 1):
        if kb % d == 0 and d * 128 <= _MAX_TK:
            best = d
    return best * 128


def _pick_tn(Np):
    """Megacore-friendly tn: keep >= 2 blocks along j whenever Np >= 256 so the
    second v7x TensorCore has work even when the M axis has a single block."""
    target = min(_MAX_TN, max(128, Np // 2))
    best = 128
    d = 128
    while d <= target:
        if Np % d == 0:
            best = d
        d += 128
    return best


def _pick_tm(Mp):
    if Mp <= 256:
        return Mp
    for t in range(256, 0, -16):
        if Mp % t == 0:
            return t
    return 16


# ---------------------------------------------------------------------------
# Pallas fused matmul kernels:
#   out = relu?( (A @ B) * scale + bias [+ residual] )
# bf16 MXU operands, f32 VMEM accumulator, f32 epilogue.
# ---------------------------------------------------------------------------
def _mm_kernel(a_ref, b_ref, sb_ref, o_ref, acc_ref, *, relu):
    @pl.when(pl.program_id(2) == 0)
    def _():
        acc_ref[...] = jnp.zeros_like(acc_ref)

    acc_ref[...] += jnp.dot(a_ref[...], b_ref[...],
                            preferred_element_type=jnp.float32)

    @pl.when(pl.program_id(2) == pl.num_programs(2) - 1)
    def _():
        sb = sb_ref[...]                                   # (2, tn) f32
        y = acc_ref[...] * sb[0:1, :] + sb[1:2, :]
        if relu:
            y = jnp.maximum(y, 0.0)
        o_ref[...] = y.astype(o_ref.dtype)


def _mm_res_kernel(a_ref, b_ref, sb_ref, r_ref, o_ref, acc_ref, *, relu):
    @pl.when(pl.program_id(2) == 0)
    def _():
        acc_ref[...] = jnp.zeros_like(acc_ref)

    acc_ref[...] += jnp.dot(a_ref[...], b_ref[...],
                            preferred_element_type=jnp.float32)

    @pl.when(pl.program_id(2) == pl.num_programs(2) - 1)
    def _():
        sb = sb_ref[...]
        # Residual add in f32 (fused shortcut + final ReLU of the bottleneck).
        y = (acc_ref[...] * sb[0:1, :] + sb[1:2, :]
             + r_ref[...].astype(jnp.float32))
        if relu:
            y = jnp.maximum(y, 0.0)
        o_ref[...] = y.astype(o_ref.dtype)


def _mm_call(kernel, a_p, b_p, sb_p, r_p, *, tk, tn, relu, out_dtype):
    Mp, Kp = a_p.shape
    Np = b_p.shape[1]
    tm = _pick_tm(Mp)
    grid = (Mp // tm, Np // tn, Kp // tk)
    in_specs = [
        pl.BlockSpec((tm, tk), lambda i, j, k: (i, k)),
        pl.BlockSpec((tk, tn), lambda i, j, k: (k, j)),
        pl.BlockSpec((2, tn), lambda i, j, k: (0, j)),
    ]
    args = [a_p, b_p, sb_p]
    if r_p is not None:
        in_specs.append(pl.BlockSpec((tm, tn), lambda i, j, k: (i, j)))
        args.append(r_p)
    return pl.pallas_call(
        functools.partial(kernel, relu=relu),
        out_shape=jax.ShapeDtypeStruct((Mp, Np), out_dtype),
        grid_spec=pltpu.PrefetchScalarGridSpec(
            num_scalar_prefetch=0,
            grid=grid,
            in_specs=in_specs,
            out_specs=pl.BlockSpec((tm, tn), lambda i, j, k: (i, j)),
            scratch_shapes=[pltpu.VMEM((tm, tn), jnp.float32)],
        ),
        compiler_params=pltpu.CompilerParams(
            dimension_semantics=("parallel", "parallel", "arbitrary"),
            vmem_limit_bytes=16 * 1024 * 1024),
    )(*args)


@functools.partial(jax.jit, static_argnames=("tk", "tn", "relu", "out_dtype"))
def _mm_padded(a_p, b_p, sb_p, *, tk, tn, relu, out_dtype):
    """a_p: (Mp, Kp) bf16 padded; returns padded (Mp, Np) — no pad/slice here."""
    return _mm_call(_mm_kernel, a_p, b_p, sb_p, None,
                    tk=tk, tn=tn, relu=relu, out_dtype=out_dtype)


@functools.partial(jax.jit, static_argnames=("tk", "tn", "relu", "out_dtype"))
def _mm_padded_res(a_p, b_p, sb_p, r_p, *, tk, tn, relu, out_dtype):
    return _mm_call(_mm_res_kernel, a_p, b_p, sb_p, r_p,
                    tk=tk, tn=tn, relu=relu, out_dtype=out_dtype)


def make_mm_params(wmat, scale, bias):
    """Pre-pad / pre-cast a weight matrix + folded scale/bias (done once)."""
    K, N = wmat.shape
    Np = _round_up(N, 128)
    tn = _pick_tn(Np)
    Kp = _round_up(K, 128)
    tk = _pick_tk(Kp)
    b_p = jnp.pad(wmat.astype(jnp.float32),
                  ((0, Kp - K), (0, Np - N))).astype(jnp.bfloat16)
    sb = jnp.stack([scale.astype(jnp.float32), bias.astype(jnp.float32)], axis=0)
    sb_p = jnp.pad(sb, ((0, 0), (0, Np - N)))
    return {'b': b_p, 'sb': sb_p, 'K': K, 'N': N, 'Kp': Kp, 'Np': Np,
            'tk': tk, 'tn': tn}


def fused_matmul_2d(x, mp, *, relu, out_dtype):
    """Generic (unpadded in / unpadded out) wrapper — used only for the 2 FC GEMMs."""
    M, K = x.shape
    Mp = _round_up(max(M, 1), 16)
    x_p = jnp.pad(x, ((0, Mp - M), (0, mp['Kp'] - K))).astype(jnp.bfloat16)
    out = _mm_padded(x_p, mp['b'], mp['sb'], tk=mp['tk'], tn=mp['tn'],
                     relu=relu, out_dtype=out_dtype)
    return out[:M, :mp['N']]


# ---------------------------------------------------------------------------
# Padded-activation ("act") layout helpers.
#   act = {'flat': (Mp, Cp) bf16, 'B', 'H', 'W', 'C'}
#   Mp = round_up(B*H*W, 16), Cp = round_up(C, 128); padded channels are zero.
# ---------------------------------------------------------------------------
def make_act(flat, B, H, W, C):
    return {'flat': flat, 'B': B, 'H': H, 'W': W, 'C': C}


def act_spatial_padded(a):
    """(B, H, W, Cp) view with padded channels kept (rows sliced if Mp > M)."""
    B, H, W = a['B'], a['H'], a['W']
    M = B * H * W
    flat = a['flat']
    if flat.shape[0] != M:
        flat = flat[:M]
    return flat.reshape(B, H, W, flat.shape[1])


def pack_spatial(x_sp, C):
    """(B, H, W, Cp) channel-padded spatial array -> packed act."""
    B, H, W, Cp = x_sp.shape
    M = B * H * W
    Mp = _round_up(M, 16)
    flat = x_sp.reshape(M, Cp)
    if Mp != M:
        flat = jnp.pad(flat, ((0, Mp - M), (0, 0)))
    return make_act(flat.astype(jnp.bfloat16), B, H, W, C)


# ---------------------------------------------------------------------------
# Conv layers (NHWC) on padded activations; BN/ReLU (and residual) fused in.
# ---------------------------------------------------------------------------
def conv1x1_act(a, cp, *, relu, res_flat=None):
    """1x1 stride-1 conv straight on the packed flat layout (no relayout)."""
    flat_in = a['flat']                                    # (Mp, Cp) == (Mp, Kp)
    assert flat_in.shape[1] == cp['Kp']
    if res_flat is None:
        flat = _mm_padded(flat_in, cp['b'], cp['sb'], tk=cp['tk'], tn=cp['tn'],
                          relu=relu, out_dtype=jnp.bfloat16)
    else:
        assert res_flat.shape == (flat_in.shape[0], cp['Np'])
        flat = _mm_padded_res(flat_in, cp['b'], cp['sb'], res_flat,
                              tk=cp['tk'], tn=cp['tn'],
                              relu=relu, out_dtype=jnp.bfloat16)
    return make_act(flat, a['B'], a['H'], a['W'], cp['N'])


def conv_spatial(x_sp, cp, *, stride, pad, relu):
    """kxk conv via im2col GEMM.  x_sp: (B, H, W, Cin_p) with Cin_p == cp['cin_p'].
    TODO(synk): replace host-side im2col with implicit GEMM (tap-loop grid axis)."""
    B, H, W, Cin_p = x_sp.shape
    kh, kw = cp['kh'], cp['kw']
    Ho = (H + 2 * pad - kh) // stride + 1
    Wo = (W + 2 * pad - kw) // stride + 1
    if kh == 1 and kw == 1 and pad == 0:
        patches = x_sp[:, ::stride, ::stride, :].reshape(B * Ho * Wo, Cin_p)
    else:
        xp = jnp.pad(x_sp, ((0, 0), (pad, pad), (pad, pad), (0, 0)))
        cols = [xp[:, i:i + stride * Ho:stride, j:j + stride * Wo:stride, :]
                for i in range(kh) for j in range(kw)]
        patches = jnp.concatenate(cols, axis=-1).reshape(B * Ho * Wo,
                                                         kh * kw * Cin_p)
    M, K = patches.shape
    Mp = _round_up(M, 16)
    patches = jnp.pad(patches, ((0, Mp - M), (0, cp['Kp'] - K))).astype(jnp.bfloat16)
    flat = _mm_padded(patches, cp['b'], cp['sb'], tk=cp['tk'], tn=cp['tn'],
                      relu=relu, out_dtype=jnp.bfloat16)
    return make_act(flat, B, Ho, Wo, cp['N'])


def maxpool_act(a):
    """nn.MaxPool2d(3, stride=2, padding=1) on the channel-padded NHWC view."""
    x = act_spatial_padded(a)
    y = lax.reduce_window(
        x, jnp.array(-jnp.inf, dtype=x.dtype), lax.max,
        window_dimensions=(1, 3, 3, 1),
        window_strides=(1, 2, 2, 1),
        padding=((0, 0), (1, 1), (1, 1), (0, 0)))
    return pack_spatial(y, a['C'])


# ---------------------------------------------------------------------------
# Affine_Trans: F.affine_grid + F.grid_sample (bilinear, align_corners=False)
# ---------------------------------------------------------------------------
def affine_grid(A, H, W):
    xs = (2.0 * jnp.arange(W, dtype=jnp.float32) + 1.0) / W - 1.0
    ys = (2.0 * jnp.arange(H, dtype=jnp.float32) + 1.0) / H - 1.0
    X, Y = jnp.meshgrid(xs, ys)                            # (H, W) each
    base = jnp.stack([X, Y, jnp.ones_like(X)], axis=-1)    # (H, W, 3)
    return jnp.einsum('hwk,bnk->bhwn', base, A)            # (B, H, W, 2)


def grid_sample_bilinear_nhwc(x, grid):
    # TODO(synk): data-dependent bilinear gather kept in plain JAX (no clean Pallas gather).
    B, H, W, C = x.shape
    gx, gy = grid[..., 0], grid[..., 1]
    ix = ((gx + 1.0) * W - 1.0) / 2.0
    iy = ((gy + 1.0) * H - 1.0) / 2.0
    ix0, iy0 = jnp.floor(ix), jnp.floor(iy)
    xf = x.reshape(B, H * W, C)
    Ho, Wo = grid.shape[1], grid.shape[2]
    out = jnp.zeros((B, Ho * Wo, C), jnp.float32)
    for xi, wx in ((ix0, 1.0 - (ix - ix0)), (ix0 + 1.0, ix - ix0)):
        for yi, wy in ((iy0, 1.0 - (iy - iy0)), (iy0 + 1.0, iy - iy0)):
            valid = (xi >= 0) & (xi <= W - 1) & (yi >= 0) & (yi <= H - 1)
            xc = jnp.clip(xi, 0, W - 1).astype(jnp.int32)
            yc = jnp.clip(yi, 0, H - 1).astype(jnp.int32)
            flat = (yc * W + xc).reshape(B, Ho * Wo)
            vals = jnp.take_along_axis(xf, flat[..., None], axis=1)
            w = (wx * wy * valid.astype(jnp.float32)).reshape(B, Ho * Wo, 1)
            out = out + vals.astype(jnp.float32) * w
    return out.reshape(B, Ho, Wo, C)


def affine_trans(x, A):
    g = affine_grid(A, x.shape[1], x.shape[2])
    return grid_sample_bilinear_nhwc(x, g)


# ---------------------------------------------------------------------------
# Deterministic parameter initialization (weights pre-prepped for the kernel)
# ---------------------------------------------------------------------------
class PInit:
    def __init__(self, seed=0):
        self.key = jax.random.PRNGKey(seed)

    def next(self):
        self.key, k = jax.random.split(self.key)
        return k

    def conv(self, cout, cin, kh, kw):
        fan_in = cin * kh * kw
        return jax.random.normal(self.next(), (cout, cin, kh, kw),
                                 jnp.float32) * jnp.sqrt(2.0 / fan_in)

    def linear(self, fin, fout):
        w = jax.random.normal(self.next(), (fin, fout), jnp.float32) * jnp.sqrt(1.0 / fin)
        b = jax.random.uniform(self.next(), (fout,), jnp.float32,
                               minval=-0.01, maxval=0.01)
        return w, b

    def bn(self, c):
        # eval-mode BN with running_mean=0, running_var=1, gamma=1, beta=0
        gamma = jnp.ones((c,), jnp.float32)
        beta = jnp.zeros((c,), jnp.float32)
        scale = gamma / jnp.sqrt(1.0 + _BN_EPS)
        bias = beta
        return scale, bias


def make_conv_bn(p, cout, cin, kh, kw, cin_pad=False):
    """Conv weight + folded BN.  With cin_pad=True the weight is built against
    the channel-padded activation layout (Cp = round_up(cin, 128)), so packed
    acts / channel-padded im2col patches feed the GEMM with no extra K pad."""
    w = p.conv(cout, cin, kh, kw)                          # PyTorch (Cout, Cin, kh, kw)
    scale, bias = p.bn(cout)
    cin_p = _round_up(cin, 128) if cin_pad else cin
    w_t = jnp.transpose(w, (2, 3, 1, 0))                   # (kh, kw, cin, cout)
    if cin_p != cin:
        w_t = jnp.pad(w_t, ((0, 0), (0, 0), (0, cin_p - cin), (0, 0)))
    wmat = w_t.reshape(kh * kw * cin_p, cout)
    mp = make_mm_params(wmat, scale, bias)
    mp['kh'], mp['kw'], mp['cin_p'] = kh, kw, cin_p
    return mp


def make_bottleneck_params(p, cin, width, stride, downsample):
    d = {
        'c1': make_conv_bn(p, width, cin, 1, 1, cin_pad=True),
        'c2': make_conv_bn(p, width, width, 3, 3, cin_pad=True),
        'c3': make_conv_bn(p, width * 4, width, 1, 1, cin_pad=True),
        'stride': stride,
    }
    if downsample:
        d['cd'] = make_conv_bn(p, width * 4, cin, 1, 1, cin_pad=True)
    return d


def make_resnet50_params(p):
    params = {'conv1': make_conv_bn(p, 64, 3, 7, 7, cin_pad=False)}
    cin = 64
    layers = []
    for (blocks, width, stride) in [(3, 64, 1), (4, 128, 2), (6, 256, 2), (3, 512, 2)]:
        layer = []
        for b in range(blocks):
            s = stride if b == 0 else 1
            layer.append(make_bottleneck_params(p, cin, width, s, downsample=(b == 0)))
            cin = width * 4
        layers.append(layer)
    params['layers'] = layers
    return params


def make_mapan_params(N, seed=0):
    p = PInit(seed)
    params = {
        'res_v': make_resnet50_params(p),
        'res_a': make_resnet50_params(p),
        'res_i': make_resnet50_params(p),
    }
    # Grid_Network (tiny, runs via jnp.dot).  The final bias is initialized to
    # the identity affine (STN-style) so the sampled grid is well-posed with
    # synthetic weights; the forward computation itself is unchanged.
    w1, b1 = p.linear(2048, 64)
    w2, b2 = p.linear(64, 6)
    b2 = b2 + jnp.array([1.0, 0.0, 0.0, 0.0, 1.0, 0.0], jnp.float32)
    params['grid'] = {'w1': w1, 'b1': b1, 'w2': w2, 'b2': b2}
    # Feature_Embed (only fc1_1 / fc2_1 are used in the PyTorch forward)
    w11, b11 = p.linear(2048, 512)
    bn_s, bn_b = p.bn(512)
    w21, b21 = p.linear(512, N)
    params['fe'] = {
        # Linear bias folded into the eval-mode BatchNorm1d affine.
        'fc1': make_mm_params(w11, bn_s, bn_s * b11 + bn_b),
        'fc2': make_mm_params(w21, jnp.ones((N,), jnp.float32), b21),
    }
    return params


# ---------------------------------------------------------------------------
# Forward passes (padded NHWC-flat bf16 activations end-to-end)
# ---------------------------------------------------------------------------
def bottleneck_fwd(a, d):
    s = d['stride']
    out = conv1x1_act(a, d['c1'], relu=True)
    out = conv_spatial(act_spatial_padded(out), d['c2'], stride=s, pad=1, relu=True)
    if 'cd' in d:
        res = conv_spatial(act_spatial_padded(a), d['cd'], stride=s, pad=0, relu=False)
        res_flat = res['flat']
    else:
        res_flat = a['flat']                               # identity shortcut (already padded)
    # Residual add + final ReLU fused into the c3 GEMM epilogue (f32).
    return conv1x1_act(out, d['c3'], relu=True, res_flat=res_flat)


def res_block_fwd(x_nhwc, params):
    # x_nhwc: (B, H, W, 3) real-channel NHWC
    a = conv_spatial(x_nhwc, params['conv1'], stride=2, pad=3, relu=True)
    a = maxpool_act(a)
    for layer in params['layers']:
        for blk in layer:
            a = bottleneck_fwd(a, blk)
    x5 = a
    sp = act_spatial_padded(a)[..., :a['C']]
    pooled = jnp.mean(sp.astype(jnp.float32), axis=(1, 2))  # AdaptiveAvgPool2d(1) -> (B, 2048)
    return pooled, x5


def grid_network_fwd(pooled, gp):
    # Tiny MLP (M = batch): a Pallas launch here is pure overhead -> plain jnp.dot.
    B = pooled.shape[0]
    x = jnp.dot(pooled, gp['w1']) + gp['b1']
    x = jnp.dot(x, gp['w2']) + gp['b2']
    return x.reshape(B, 2, 3)


def feature_embed_fwd(v, i, fp):
    B = v.shape[0]
    # Both streams share fc1_1/fc2_1 -> run them stacked as one GEMM.
    x12 = jnp.concatenate([v, i], axis=0)                                      # (2B, 2048)
    feature = fused_matmul_2d(x12, fp['fc1'], relu=False, out_dtype=jnp.float32)  # Linear+BN
    h = jnp.maximum(feature, 0.0)                                              # ReLU inside fc2_1
    logits = fused_matmul_2d(h, fp['fc2'], relu=False, out_dtype=jnp.float32)
    probs = jax.nn.softmax(logits, axis=1)
    return probs[:B], probs[B:], feature[:B], feature[B:]


def mapan_forward(V, I, params, lam=0.9):
    # Only relayout in the whole network: model-boundary NCHW -> NHWC.
    V_nhwc = jnp.transpose(V, (0, 2, 3, 1))
    I_nhwc = jnp.transpose(I, (0, 2, 3, 1))
    v, _v5 = res_block_fwd(V_nhwc, params['res_v'])
    i, _ = res_block_fwd(I_nhwc, params['res_i'])
    A = grid_network_fwd(v, params['grid'])          # avgpool(v5) == v
    a_img = affine_trans(V_nhwc, A)
    a, _ = res_block_fwd(a_img, params['res_a'])
    v = lam * v + (1.0 - lam) * a
    return feature_embed_fwd(v, i, params['fe'])


# ---------------------------------------------------------------------------
if __name__ == "__main__":
    N = 8
    B, C, H, W = 2, 3, 32, 32
    key = jax.random.PRNGKey(0)
    kv, ki = jax.random.split(key)
    V = jax.random.normal(kv, (B, C, H, W), jnp.float32)
    I = jax.random.normal(ki, (B, C, H, W), jnp.float32)

    params = make_mapan_params(N, seed=0)
    v_out, i_out, v_f, i_f = mapan_forward(V, I, params, lam=0.9)
    for o in (v_out, i_out, v_f, i_f):
        jax.block_until_ready(o)

    assert v_out.shape == (B, N) and i_out.shape == (B, N)
    assert v_f.shape == (B, 512) and i_f.shape == (B, 512)
    assert all(bool(jnp.all(jnp.isfinite(o))) for o in (v_out, i_out, v_f, i_f))
    print("KERNEL_OK")
</pallas_src>

<mosaic_0001>
module attributes {stable_mosaic.version = 11 : i64} {
  func.func @_mm_kernel(%arg0: i32, %arg1: i32, %arg2: i32, %arg3: memref<256x256xbf16, #tpu.memory_space<vmem>>, %arg4: memref<256x128xbf16, #tpu.memory_space<vmem>>, %arg5: memref<2x128xf32, #tpu.memory_space<vmem>>, %arg6: memref<256x128xbf16, #tpu.memory_space<vmem>>, %arg7: memref<256x128xf32, #tpu.memory_space<vmem>>) attributes {dimension_semantics = [#tpu.dimension_semantics<parallel>, #tpu.dimension_semantics<parallel>, #tpu.dimension_semantics<arbitrary>], iteration_bounds = array<i64: 2, 1, 1>, scalar_prefetch = 0 : i64, scratch_operands = 1 : i64, tpu.core_type = #tpu.core_type<tc>, window_params = [{transform_indices = @transform_0, window_bounds = array<i64: 256, 256>}, {transform_indices = @transform_1, window_bounds = array<i64: 256, 128>}, {transform_indices = @transform_2, window_bounds = array<i64: 2, 128>}, {transform_indices = @transform_3, window_bounds = array<i64: 256, 128>}]} {
    %c0_i32 = arith.constant 0 : i32
    %0 = arith.cmpi eq, %arg2, %c0_i32 : i32
    %1 = arith.extui %0 : i1 to i32
    %c0_i32_0 = arith.constant 0 : i32
    %2 = arith.cmpi ne, %1, %c0_i32_0 : i32
    scf.if %2 {
      %cst_10 = arith.constant 0.000000e+00 : f32
      %12 = vector.broadcast %cst_10 : f32 to vector<256x128xf32>
      %c0_11 = arith.constant 0 : index
      %c0_12 = arith.constant 0 : index
      %13 = vector.load %arg7[%c0_11, %c0_12] : memref<256x128xf32, #tpu.memory_space<vmem>>, vector<256x128xf32>
      tpu.vector_store %arg7[%c0_11, %c0_12], %12 {strides = array<i32>} : memref<256x128xf32, #tpu.memory_space<vmem>>, vector<256x128xf32>,
    } else {
    }
    %c0 = arith.constant 0 : index
    %c0_1 = arith.constant 0 : index
    %3 = vector.load %arg7[%c0, %c0_1] : memref<256x128xf32, #tpu.memory_space<vmem>>, vector<256x128xf32>
    %c0_2 = arith.constant 0 : index
    %c0_3 = arith.constant 0 : index
    %4 = vector.load %arg3[%c0_2, %c0_3] : memref<256x256xbf16, #tpu.memory_space<vmem>>, vector<256x256xbf16>
    %c0_4 = arith.constant 0 : index
    %c0_5 = arith.constant 0 : index
    %5 = vector.load %arg4[%c0_4, %c0_5] : memref<256x128xbf16, #tpu.memory_space<vmem>>, vector<256x128xbf16>
    %cst = arith.constant dense<0.000000e+00> : vector<256x128xf32>
    %6 = tpu.matmul %4, %5, %cst {dimension_numbers = #tpu.dot_dimension_numbers<[1], [0], [0], [1], [0, 0, 1, 1], [], []>} : vector<256x256xbf16>, vector<256x128xbf16>, vector<256x128xf32> -> vector<256x128xf32>
    %7 = arith.addf %3, %6 : vector<256x128xf32>
    %c0_6 = arith.constant 0 : index
    %c0_7 = arith.constant 0 : index
    %8 = vector.load %arg7[%c0_6, %c0_7] : memref<256x128xf32, #tpu.memory_space<vmem>>, vector<256x128xf32>
    tpu.vector_store %arg7[%c0_6, %c0_7], %7 {strides = array<i32>} : memref<256x128xf32, #tpu.memory_space<vmem>>, vector<256x128xf32>,
    %c0_i32_8 = arith.constant 0 : i32
    %9 = arith.cmpi eq, %arg2, %c0_i32_8 : i32
    %10 = arith.extui %9 : i1 to i32
    %c0_i32_9 = arith.constant 0 : i32
    %11 = arith.cmpi ne, %10, %c0_i32_9 : i32
    scf.if %11 {
      %c0_10 = arith.constant 0 : index
      %c0_11 = arith.constant 0 : index
      %12 = vector.load %arg5[%c0_10, %c0_11] : memref<2x128xf32, #tpu.memory_space<vmem>>, vector<2x128xf32>
      %c0_12 = arith.constant 0 : index
      %c0_13 = arith.constant 0 : index
      %13 = vector.load %arg7[%c0_12, %c0_13] : memref<256x128xf32, #tpu.memory_space<vmem>>, vector<256x128xf32>
      %14 = vector.extract_strided_slice %12 {offsets = [0, 0], sizes = [1, 128], strides = [1, 1]} : vector<2x128xf32> to vector<1x128xf32>
      %15 = vector.broadcast %14 : vector<1x128xf32> to vector<256x128xf32>
      %16 = arith.mulf %13, %15 : vector<256x128xf32>
      %17 = vector.extract_strided_slice %12 {offsets = [1, 0], sizes = [1, 128], strides = [1, 1]} : vector<2x128xf32> to vector<1x128xf32>
      %18 = vector.broadcast %17 : vector<1x128xf32> to vector<256x128xf32>
      %19 = arith.addf %16, %18 : vector<256x128xf32>
      %cst_14 = arith.constant 0.000000e+00 : f32
      %20 = vector.broadcast %cst_14 : f32 to vector<256x128xf32>
      %21 = arith.maximumf %19, %20 : vector<256x128xf32>
      %22 = arith.truncf %21 : vector<256x128xf32> to vector<256x128xbf16>
      %c0_15 = arith.constant 0 : index
      %c0_16 = arith.constant 0 : index
      %23 = vector.load %arg6[%c0_15, %c0_16] : memref<256x128xbf16, #tpu.memory_space<vmem>>, vector<256x128xbf16>
      tpu.vector_store %arg6[%c0_15, %c0_16], %22 {strides = array<i32>} : memref<256x128xbf16, #tpu.memory_space<vmem>>, vector<256x128xbf16>,
    } else {
    }
    return
  }
  func.func @transform_0(%arg0: i32, %arg1: i32, %arg2: i32) -> (i32, i32) {
    %c0_i32 = arith.constant 0 : i32
    return %arg0, %arg2 : i32, i32
  }
  func.func @transform_1(%arg0: i32, %arg1: i32, %arg2: i32) -> (i32, i32) {
    %c0_i32 = arith.constant 0 : i32
    return %arg2, %arg1 : i32, i32
  }
  func.func @transform_2(%arg0: i32, %arg1: i32, %arg2: i32) -> (i32, i32) {
    %c0_i32 = arith.constant 0 : i32
    %c0_i32_0 = arith.constant 0 : i32
    return %c0_i32, %arg1 : i32, i32
  }
  func.func @transform_3(%arg0: i32, %arg1: i32, %arg2: i32) -> (i32, i32) {
    %c0_i32 = arith.constant 0 : i32
    return %arg0, %arg1 : i32, i32
  }
}

</mosaic_0001>

<llo_original>
// kernel: _mm_padded.1
$region0: #{_mm_padded.1}
  #allocation0 [shape = 'u32[]', space=smem, size = 0x4, offset = 0x4, fixed_abs, tag = 'smem constant byte address 0x4 - core index']
  #allocation1 [shape = 'u32[144,128]{1,0:T(1,128)}', space=vmem, size = 0x12000, scoped, tag = 'internal scratch']
  #allocation2 [shape = 'f32[256,128]{1,0:T(8,128)}', space=vmem, size = 0x20000, scoped, tag = 'scratch operand']
  %s0 = inlined_call_operand.hbm [shape: bf16[512,256], index: 0, kind: input, shape index: {}]
  %s1 = inlined_call_operand.hbm [shape: bf16[256,128], index: 1, kind: input, shape index: {}]
  %s2 = inlined_call_operand.vmem [shape: f32[2,128], index: 2, kind: input, shape index: {}]
  %s3 = inlined_call_operand.hbm [shape: bf16[512,128], index: 3, kind: output, shape index: {}]
  %s4 = sld [smem:[#allocation0]]
  $region61: #{_mm_padded.1} parent=0
    _
  %s6 = ssub.s32 1, %s4
  %s7 = scalar_select 0, %s6, %s4
  $region1: #{_mm_padded.1} parent=0
    #allocation3 [shape = 'u8[262144]{0}', space=vmem, size = 0x40000, scoped, tag = 'input window, operand 0']
    #allocation4 [shape = 's32[2]{0}', space=sflag, size = 0x8, scoped, tag = 'scoped memory for _mm_padded.1']
    #allocation5 [shape = 's32[2]{0}', space=sflag, size = 0x8, scoped, tag = 'scoped memory for _mm_padded.1']
    #allocation6 [shape = 'u8[65536]{0}', space=vmem, size = 0x10000, scoped, tag = 'input window, operand 1, single buffered']
    #allocation7 [shape = 's32[1]{0}', space=sflag, size = 0x4, scoped, tag = 'scoped memory for _mm_padded.1']
    #allocation8 [shape = 'u8[131072]{0}', space=vmem, size = 0x20000, scoped, tag = 'output window, operand 0']
    %8 = vsyncpa [#allocation4], 0
    %s9 = scalar_lea.sflag [#allocation4], 1
    %10 = vsyncpa %s9, 0
    %11 = vsyncpa [#allocation7], 0
    %12 = vsyncpa [#allocation5], 0
    %s13 = scalar_lea.sflag [#allocation5], 1
    %14 = vsyncpa %s13, 0
    loop: start=0, step=1, limit=4
    $region2: #{_mm_padded.1} parent=1 // loop_pre_header
      _
    $region3: #{_mm_padded.1} parent=1 // loop_header
      %s16 = sphi 0, %s20
      %p17 = scmp.ge.s32.totalorder %s16, 4
      %s23 = sphi 0, %s42
      %s24 = sphi 0, %s38
      %s25 = sphi 0, %s34
      %s26 = sphi 0, %s23
      %s27 = sphi 0, %s24
      %s28 = sphi 0, %s25
      %s29 = sphi 0, %s26
      %s30 = sphi 0, %s27
      %s31 = sphi 0, %s28
      %s47 = sphi 0, %s49
      %s50 = sphi 0, %s47
      %s51 = sphi 0, %s50
      %s67 = sphi 0, %s51
      %s75 = sphi 0, %s77
      %s78 = sphi 0, %s75
      %s79 = sphi 0, %s78
      %s95 = sphi 0, %s79
      %s101 = sphi 0, %s103
      %s104 = sphi 0, %s101
      %s105 = sphi 0, %s104
      %s121 = sphi 0, %s105
      %s129 = sphi 0, %s131
      %s132 = sphi 0, %s129
      %s133 = sphi 0, %s132
      %s149 = sphi 0, %s133
    $region4: #{_mm_padded.1} parent=1 // loop_header_branch
      %19 = sbr.rel (%p17) target = $region8
    $region5: #{_mm_padded.1} parent=1 // loop_body
      %s21 = ssub.s32 %s16, 1
      %s22 = ssub.s32 %s16, 2
      %s32 = sadd.s32 1, %s25
      %p33 = scmp.ge.s32.totalorder %s32, 1
      %s34 = scalar_select %p33, 0, %s32
      %s35 = sadd.s32 1, %s24
      %s36 = scalar_select %p33, %s35, %s24
      %p37 = scmp.ge.s32.totalorder %s36, 1
      %s38 = scalar_select %p37, 0, %s36
      %s39 = sadd.s32 1, %s23
      %s40 = scalar_select %p37, %s39, %s23
      %p41 = scmp.ge.s32.totalorder %s40, 2
      %s42 = scalar_select %p41, 0, %s40
      %s43 = ssub.s32 %s23, %s42
      %s44 = ssub.s32 %s25, %s34
      %s45 = sor.u32 %s43, %s44
      %p46 = scmp.eq.s32.totalorder %s45, 0
      %s48 = sadd.s32 %s47, 1
      %s49 = scalar_select %p46, %s47, %s48
      %p52 = pneg %p46
      %p53 = scmp.eq.s32.totalorder %s16, 1
      %p54 = por %p52, %p53
      %p55 = scmp.ne.s32.totalorder %s47, %s50
      %p56 = scmp.eq.s32.totalorder %s16, 0
      %p57 = por %p55, %p56
      %p58 = scmp.ne.s32.totalorder %s47, %s50
      %p59 = scmp.eq.s32.totalorder %s21, 1
      %p60 = por %p58, %p59
      %p61 = scmp.ne.s32.totalorder %s50, %s51
      %p62 = scmp.eq.s32.totalorder %s21, 0
      %p63 = por %p61, %p62
      %p64 = scmp.ne.s32.totalorder %s50, %s51
      %p65 = scmp.eq.s32.totalorder %s22, 1
      %p66 = por %p64, %p65
      %p68 = scmp.ne.s32.totalorder %s51, %s67
      %p69 = scmp.eq.s32.totalorder %s22, 0
      %p70 = por %p68, %p69
      %s71 = ssub.s32 %s25, %s34
      %s72 = ssub.s32 %s24, %s38
      %s73 = sor.u32 %s71, %s72
      %p74 = scmp.eq.s32.totalorder %s73, 0
      %s76 = sadd.s32 %s75, 1
      %s77 = scalar_select %p74, %s75, %s76
      %p80 = pneg %p74
      %p81 = scmp.eq.s32.totalorder %s16, 1
      %p82 = por %p80, %p81
      %p83 = scmp.ne.s32.totalorder %s75, %s78
      %p84 = scmp.eq.s32.totalorder %s16, 0
      %p85 = por %p83, %p84
      %p86 = scmp.ne.s32.totalorder %s75, %s78
      %p87 = scmp.eq.s32.totalorder %s21, 1
      %p88 = por %p86, %p87
      %p89 = scmp.ne.s32.totalorder %s78, %s79
      %p90 = scmp.eq.s32.totalorder %s21, 0
      %p91 = por %p89, %p90
      %p92 = scmp.ne.s32.totalorder %s78, %s79
      %p93 = scmp.eq.s32.totalorder %s22, 1
      %p94 = por %p92, %p93
      %p96 = scmp.ne.s32.totalorder %s79, %s95
      %p97 = scmp.eq.s32.totalorder %s22, 0
      %p98 = por %p96, %p97
      %s99 = ssub.s32 %s24, %s38
      %p100 = scmp.eq.s32.totalorder %s99, 0
      %s102 = sadd.s32 %s101, 1
      %s103 = scalar_select %p100, %s101, %s102
      %p106 = pneg %p100
      %p107 = scmp.eq.s32.totalorder %s16, 1
      %p108 = por %p106, %p107
      %p109 = scmp.ne.s32.totalorder %s101, %s104
      %p110 = scmp.eq.s32.totalorder %s16, 0
      %p111 = por %p109, %p110
      %p112 = scmp.ne.s32.totalorder %s101, %s104
      %p113 = scmp.eq.s32.totalorder %s21, 1
      %p114 = por %p112, %p113
      %p115 = scmp.ne.s32.totalorder %s104, %s105
      %p116 = scmp.eq.s32.totalorder %s21, 0
      %p117 = por %p115, %p116
      %p118 = scmp.ne.s32.totalorder %s104, %s105
      %p119 = scmp.eq.s32.totalorder %s22, 1
      %p120 = por %p118, %p119
      %p122 = scmp.ne.s32.totalorder %s105, %s121
      %p123 = scmp.eq.s32.totalorder %s22, 0
      %p124 = por %p122, %p123
      %s125 = ssub.s32 %s23, %s42
      %s126 = ssub.s32 %s24, %s38
      %s127 = sor.u32 %s125, %s126
      %p128 = scmp.eq.s32.totalorder %s127, 0
      %s130 = sadd.s32 %s129, 1
      %s131 = scalar_select %p128, %s129, %s130
      %p134 = pneg %p128
      %p135 = scmp.eq.s32.totalorder %s16, 1
      %p136 = por %p134, %p135
      %p137 = scmp.ne.s32.totalorder %s129, %s132
      %p138 = scmp.eq.s32.totalorder %s16, 0
      %p139 = por %p137, %p138
      %p140 = scmp.ne.s32.totalorder %s129, %s132
      %p141 = scmp.eq.s32.totalorder %s21, 1
      %p142 = por %p140, %p141
      %p143 = scmp.ne.s32.totalorder %s132, %s133
      %p144 = scmp.eq.s32.totalorder %s21, 0
      %p145 = por %p143, %p144
      %p146 = scmp.ne.s32.totalorder %s132, %s133
      %p147 = scmp.eq.s32.totalorder %s22, 1
      %p148 = por %p146, %p147
      %p150 = scmp.ne.s32.totalorder %s133, %s149
      %p151 = scmp.eq.s32.totalorder %s22, 0
      %p152 = por %p150, %p151
      %p153 = scmp.le.s32.totalorder 1, %s16
      %p154 = scmp.lt.s32.totalorder %s16, 3
      %p155 = pnand %p153, %p154
      %p156 = pneg %p155
      // Predicated region
      $region9: #{_mm_padded.1} parent=5 // pred_check
        _
      $region10: #{_mm_padded.1} parent=5 // pred_check_branch
        %158 = sbr.rel (%p155) target = $region12
      $region11: #{_mm_padded.1} parent=5 // pred_region
        %s159 = ssub.s32 %s16, 1
        // Predicated region
        $region13: #{_mm_padded.1} parent=11 // pred_check
          %p160 = pneg %p91
        $region14: #{_mm_padded.1} parent=11 // pred_check_branch
          %162 = sbr.rel (%p160) target = $region16
        $region15: #{_mm_padded.1} parent=11 // pred_region
          %s163 = smul.u32 32, %s28
          %s165 = ssub.s32 2048, 2048
          %166 = vsyncadd [#allocation7], %s165
          %s167 = sadd.s32 %s27, %s163
          %s168 = smul.addr %s167, 64
          %s169 = scalar_lea.hbm %s1, %s168
          %s170 = sshll.u32 [#allocation6], 4
          %s171 = int_to_ptr.vmem [resolvable:$true] %s170
          %176 = dma.hbm_to_vmem [thread:$0]  %s169, 2048, %s171, [#allocation7], 64, 64, 4
        $region16: #{_mm_padded.1} parent=11 // pred_fallthru
          _
        // Predicated region
        $region17: #{_mm_padded.1} parent=11 // pred_check
          %p177 = pneg %p117
        $region18: #{_mm_padded.1} parent=11 // pred_check_branch
          %179 = sbr.rel (%p177) target = $region20
        $region19: #{_mm_padded.1} parent=11 // pred_region
          %p180 = scmp.lt.s32.totalorder %s27, 0
          %s181 = scalar_select %p180, %s27, 0
          %s182 = smul.addr %s181, 2
          %s183 = scalar_lea.vmem %s2, %s182
        $region20: #{_mm_padded.1} parent=11 // pred_fallthru
          _
      $region12: #{_mm_padded.1} parent=5 // pred_fallthru
        _
      %p184 = scmp.lt.s32.totalorder %s16, 2
      // Predicated region
      $region21: #{_mm_padded.1} parent=5 // pred_check
        %p185 = pneg %p184
      $region22: #{_mm_padded.1} parent=5 // pred_check_branch
        %187 = sbr.rel (%p185) target = $region24
      $region23: #{_mm_padded.1} parent=5 // pred_region
        // Predicated region
        $region25: #{_mm_padded.1} parent=23 // pred_check
          %p188 = pneg %p57
        $region26: #{_mm_padded.1} parent=23 // pred_check_branch
          %190 = sbr.rel (%p188) target = $region28
        $region27: #{_mm_padded.1} parent=23 // pred_region
          %s191 = sand.u32 %s47, 1
          %s192 = scalar_lea.sflag [#allocation4], %s191
          %s193 = sand.u32 %s47, 1
          %s194 = smul.addr %s193, 256
          %s195 = scalar_lea.vmem [#allocation3], %s194
          %s196 = smul.u32 32, %s23
          %s197 = smul.u32 2, %s25
          %s199 = ssub.s32 4096, 4096
          %200 = vsyncadd %s192, %s199
          %s201 = smul.addr %s196, 2
          %s202 = sadd.s32 %s197, %s201
          %s203 = smul.addr %s202, 64
          %s204 = scalar_lea.hbm %s0, %s203
          %s205 = sshll.u32 %s195, 4
          %s206 = int_to_ptr.vmem [resolvable:$true] %s205
          %211 = dma.hbm_to_vmem [thread:$0]  %s204, 4096, %s206, %s192, 128, 128, 8
        $region28: #{_mm_padded.1} parent=23 // pred_fallthru
          _
      $region24: #{_mm_padded.1} parent=5 // pred_fallthru
        _
      %p212 = scmp.le.s32.totalorder 1, %s16
      %p213 = scmp.lt.s32.totalorder %s16, 3
      %p214 = pnand %p212, %p213
      %p215 = pneg %p214
      // Predicated region
      $region29: #{_mm_padded.1} parent=5 // pred_check
        _
      $region30: #{_mm_padded.1} parent=5 // pred_check_branch
        %217 = sbr.rel (%p214) target = $region32
      $region31: #{_mm_padded.1} parent=5 // pred_region
        %s218 = ssub.s32 %s16, 1
        %s219 = sand.u32 %s50, 1
        %s220 = scalar_lea.sflag [#allocation4], %s219
        %s221 = sand.u32 %s50, 1
        %s222 = smul.addr %s221, 256
        %s223 = scalar_lea.vmem [#allocation3], %s222
        // Predicated region
        $region33: #{_mm_padded.1} parent=31 // pred_check
          %p224 = pneg %p63
        $region34: #{_mm_padded.1} parent=31 // pred_check_branch
          %226 = sbr.rel (%p224) target = $region36
        $region35: #{_mm_padded.1} parent=31 // pred_region
          %227 = dma.done %s220, 4096
        $region36: #{_mm_padded.1} parent=31 // pred_fallthru
          _
        // Predicated region
        $region37: #{_mm_padded.1} parent=31 // pred_check
          %p228 = pneg %p91
        $region38: #{_mm_padded.1} parent=31 // pred_check_branch
          %230 = sbr.rel (%p228) target = $region40
        $region39: #{_mm_padded.1} parent=31 // pred_region
          %231 = dma.done [#allocation7], 2048
        $region40: #{_mm_padded.1} parent=31 // pred_fallthru
          _
        %s232 = sand.u32 %s50, 1
        %s233 = scalar_lea.sflag [#allocation4], %s232
        %s234 = sand.u32 %s50, 1
        %s235 = smul.addr %s234, 256
        %s236 = scalar_lea.vmem [#allocation3], %s235
        %p237 = pneg %p63
        %p238 = pneg %p60
        %p239 = pneg %p91
        %p240 = pneg %p88
        %p241 = scmp.lt.s32.totalorder %s27, 0
        %s242 = scalar_select %p241, %s27, 0
        %s243 = smul.addr %s242, 2
        %s244 = scalar_lea.vmem %s2, %s243
        %p245 = pneg %p117
        %p246 = pneg %p114
        %p247 = pneg %p145
        %p248 = pneg %p142
        %s249 = sand.u32 %s132, 1
        %s250 = scalar_lea.sflag [#allocation5], %s249
        %s251 = sand.u32 %s132, 1
        %s252 = smul.addr %s251, 128
        %s253 = scalar_lea.vmem [#allocation8], %s252
        %s254 = smul.u32 32, %s26
        %s255 = smul.u32 2, %s28
        %s256 = smul.u32 32, %s28
        %p257 = scmp.lt.s32.totalorder %s27, 0
        %s258 = scalar_select %p257, %s27, 0
        %s259 = smul.addr %s258, 2
        %s260 = scalar_lea.vmem %s2, %s259
        %s261 = smul.u32 32, %s26
        %p263 = scmp.eq.s32.totalorder %s28, 0
        // Predicated region
        $region41: #{_mm_padded.1} parent=31 // pred_check
          %p264 = pneg %p263
        $region42: #{_mm_padded.1} parent=31 // pred_check_branch
          %266 = sbr.rel (%p264) target = $region44
        $region43: #{_mm_padded.1} parent=31 // pred_region
          %267 = vst [vmem:[#allocation2] sm:$0xff] 0.0
          %268 = vst [vmem:[#allocation2 + $0x8] sm:$0xff] 0.0
          %269 = vst [vmem:[#allocation2 + $0x10] sm:$0xff] 0.0
          %270 = vst [vmem:[#allocation2 + $0x18] sm:$0xff] 0.0
          %271 = vst [vmem:[#allocation2 + $0x20] sm:$0xff] 0.0
          %272 = vst [vmem:[#allocation2 + $0x28] sm:$0xff] 0.0
          %273 = vst [vmem:[#allocation2 + $0x30] sm:$0xff] 0.0
          %274 = vst [vmem:[#allocation2 + $0x38] sm:$0xff] 0.0
          %275 = vst [vmem:[#allocation2 + $0x40] sm:$0xff] 0.0
          %276 = vst [vmem:[#allocation2 + $0x48] sm:$0xff] 0.0
          %277 = vst [vmem:[#allocation2 + $0x50] sm:$0xff] 0.0
          %278 = vst [vmem:[#allocation2 + $0x58] sm:$0xff] 0.0
          %279 = vst [vmem:[#allocation2 + $0x60] sm:$0xff] 0.0
          %280 = vst [vmem:[#allocation2 + $0x68] sm:$0xff] 0.0
          %281 = vst [vmem:[#allocation2 + $0x70] sm:$0xff] 0.0
          %282 = vst [vmem:[#allocation2 + $0x78] sm:$0xff] 0.0
          %283 = vst [vmem:[#allocation2 + $0x80] sm:$0xff] 0.0
          %284 = vst [vmem:[#allocation2 + $0x88] sm:$0xff] 0.0
          %285 = vst [vmem:[#allocation2 + $0x90] sm:$0xff] 0.0
          %286 = vst [vmem:[#allocation2 + $0x98] sm:$0xff] 0.0
          %287 = vst [vmem:[#allocation2 + $0xa0] sm:$0xff] 0.0
          %288 = vst [vmem:[#allocation2 + $0xa8] sm:$0xff] 0.0
          %289 = vst [vmem:[#allocation2 + $0xb0] sm:$0xff] 0.0
          %290 = vst [vmem:[#allocation2 + $0xb8] sm:$0xff] 0.0
          %291 = vst [vmem:[#allocation2 + $0xc0] sm:$0xff] 0.0
          %292 = vst [vmem:[#allocation2 + $0xc8] sm:$0xff] 0.0
          %293 = vst [vmem:[#allocation2 + $0xd0] sm:$0xff] 0.0
          %294 = vst [vmem:[#allocation2 + $0xd8] sm:$0xff] 0.0
          %295 = vst [vmem:[#allocation2 + $0xe0] sm:$0xff] 0.0
          %296 = vst [vmem:[#allocation2 + $0xe8] sm:$0xff] 0.0
          %297 = vst [vmem:[#allocation2 + $0xf0] sm:$0xff] 0.0
          %298 = vst [vmem:[#allocation2 + $0xf8] sm:$0xff] 0.0
        $region44: #{_mm_padded.1} parent=31 // pred_fallthru
          _
        %v299 = vld [vmem:[#allocation2] sm:$0xff]
        %v300 = vld [vmem:[#allocation2 + $0x8] sm:$0xff]
        %v301 = vld [vmem:[#allocation2 + $0x10] sm:$0xff]
        %v302 = vld [vmem:[#allocation2 + $0x18] sm:$0xff]
        %v303 = vld [vmem:[#allocation2 + $0x20] sm:$0xff]
        %v304 = vld [vmem:[#allocation2 + $0x28] sm:$0xff]
        %v305 = vld [vmem:[#allocation2 + $0x30] sm:$0xff]
        %v306 = vld [vmem:[#allocation2 + $0x38] sm:$0xff]
        %v307 = vld [vmem:[#allocation2 + $0x40] sm:$0xff]
        %v308 = vld [vmem:[#allocation2 + $0x48] sm:$0xff]
        %v309 = vld [vmem:[#allocation2 + $0x50] sm:$0xff]
        %v310 = vld [vmem:[#allocation2 + $0x58] sm:$0xff]
        %v311 = vld [vmem:[#allocation2 + $0x60] sm:$0xff]
        %v312 = vld [vmem:[#allocation2 + $0x68] sm:$0xff]
        %v313 = vld [vmem:[#allocation2 + $0x70] sm:$0xff]
        %v314 = vld [vmem:[#allocation2 + $0x78] sm:$0xff]
        %v315 = vld [vmem:[#allocation2 + $0x80] sm:$0xff]
        %v316 = vld [vmem:[#allocation2 + $0x88] sm:$0xff]
        %v317 = vld [vmem:[#allocation2 + $0x90] sm:$0xff]
        %v318 = vld [vmem:[#allocation2 + $0x98] sm:$0xff]
        %v319 = vld [vmem:[#allocation2 + $0xa0] sm:$0xff]
        %v320 = vld [vmem:[#allocation2 + $0xa8] sm:$0xff]
        %v321 = vld [vmem:[#allocation2 + $0xb0] sm:$0xff]
        %v322 = vld [vmem:[#allocation2 + $0xb8] sm:$0xff]
        %v323 = vld [vmem:[#allocation2 + $0xc0] sm:$0xff]
        %v324 = vld [vmem:[#allocation2 + $0xc8] sm:$0xff]
        %v325 = vld [vmem:[#allocation2 + $0xd0] sm:$0xff]
        %v326 = vld [vmem:[#allocation2 + $0xd8] sm:$0xff]
        %v327 = vld [vmem:[#allocation2 + $0xe0] sm:$0xff]
        %v328 = vld [vmem:[#allocation2 + $0xe8] sm:$0xff]
        %v329 = vld [vmem:[#allocation2 + $0xf0] sm:$0xff]
        %v330 = vld [vmem:[#allocation2 + $0xf8] sm:$0xff]
        %v331 = vld [vmem:[%s223] sm:$0xff]
        %v332 = vld [vmem:[%s223 + $0x8] sm:$0xff]
        %v333 = vld [vmem:[%s223 + $0x10] sm:$0xff]
        %v334 = vld [vmem:[%s223 + $0x18] sm:$0xff]
        %v335 = vld [vmem:[%s223 + $0x20] sm:$0xff]
        %v336 = vld [vmem:[%s223 + $0x28] sm:$0xff]
        %v337 = vld [vmem:[%s223 + $0x30] sm:$0xff]
        %v338 = vld [vmem:[%s223 + $0x38] sm:$0xff]
        %v339 = vld [vmem:[%s223 + $0x40] sm:$0xff]
        %v340 = vld [vmem:[%s223 + $0x48] sm:$0xff]
        %v341 = vld [vmem:[%s223 + $0x50] sm:$0xff]
        %v342 = vld [vmem:[%s223 + $0x58] sm:$0xff]
        %v343 = vld [vmem:[%s223 + $0x60] sm:$0xff]
        %v344 = vld [vmem:[%s223 + $0x68] sm:$0xff]
        %v345 = vld [vmem:[%s223 + $0x70] sm:$0xff]
        %v346 = vld [vmem:[%s223 + $0x78] sm:$0xff]
        %v347 = vld [vmem:[%s223 + $0x80] sm:$0xff]
        %v348 = vld [vmem:[%s223 + $0x88] sm:$0xff]
        %v349 = vld [vmem:[%s223 + $0x90] sm:$0xff]
        %v350 = vld [vmem:[%s223 + $0x98] sm:$0xff]
        %v351 = vld [vmem:[%s223 + $0xa0] sm:$0xff]
        %v352 = vld [vmem:[%s223 + $0xa8] sm:$0xff]
        %v353 = vld [vmem:[%s223 + $0xb0] sm:$0xff]
        %v354 = vld [vmem:[%s223 + $0xb8] sm:$0xff]
        %v355 = vld [vmem:[%s223 + $0xc0] sm:$0xff]
        %v356 = vld [vmem:[%s223 + $0xc8] sm:$0xff]
        %v357 = vld [vmem:[%s223 + $0xd0] sm:$0xff]
        %v358 = vld [vmem:[%s223 + $0xd8] sm:$0xff]
        %v359 = vld [vmem:[%s223 + $0xe0] sm:$0xff]
        %v360 = vld [vmem:[%s223 + $0xe8] sm:$0xff]
        %v361 = vld [vmem:[%s223 + $0xf0] sm:$0xff]
        %v362 = vld [vmem:[%s223 + $0xf8] sm:$0xff]
        %v363 = vld [vmem:[#allocation6] sm:$0xf]
        %v364 = vld [vmem:[#allocation6 + $0x4] sm:$0xf]
        %v365 = vld [vmem:[#allocation6 + $0x8] sm:$0xf]
        %v366 = vld [vmem:[#allocation6 + $0xc] sm:$0xf]
        %v367 = vld [vmem:[#allocation6 + $0x10] sm:$0xf]
        %v368 = vld [vmem:[#allocation6 + $0x14] sm:$0xf]
        %v369 = vld [vmem:[#allocation6 + $0x18] sm:$0xf]
        %v370 = vld [vmem:[#allocation6 + $0x1c] sm:$0xf]
        %v371 = vld [vmem:[#allocation6 + $0x20] sm:$0xf]
        %v372 = vld [vmem:[#allocation6 + $0x24] sm:$0xf]
        %v373 = vld [vmem:[#allocation6 + $0x28] sm:$0xf]
        %v374 = vld [vmem:[#allocation6 + $0x2c] sm:$0xf]
        %v375 = vld [vmem:[#allocation6 + $0x30] sm:$0xf]
        %v376 = vld [vmem:[#allocation6 + $0x34] sm:$0xf]
        %v377 = vld [vmem:[#allocation6 + $0x38] sm:$0xf]
        %v378 = vld [vmem:[#allocation6 + $0x3c] sm:$0xf]
        %v379 = vld [vmem:[#allocation6 + $0x40] sm:$0xf]
        %v380 = vld [vmem:[#allocation6 + $0x44] sm:$0xf]
        %v381 = vld [vmem:[#allocation6 + $0x48] sm:$0xf]
        %v382 = vld [vmem:[#allocation6 + $0x4c] sm:$0xf]
        %v383 = vld [vmem:[#allocation6 + $0x50] sm:$0xf]
        %v384 = vld [vmem:[#allocation6 + $0x54] sm:$0xf]
        %v385 = vld [vmem:[#allocation6 + $0x58] sm:$0xf]
        %v386 = vld [vmem:[#allocation6 + $0x5c] sm:$0xf]
        %v387 = vld [vmem:[#allocation6 + $0x60] sm:$0xf]
        %v388 = vld [vmem:[#allocation6 + $0x64] sm:$0xf]
        %v389 = vld [vmem:[#allocation6 + $0x68] sm:$0xf]
        %v390 = vld [vmem:[#allocation6 + $0x6c] sm:$0xf]
        %v391 = vld [vmem:[#allocation6 + $0x70] sm:$0xf]
        %v392 = vld [vmem:[#allocation6 + $0x74] sm:$0xf]
        %v393 = vld [vmem:[#allocation6 + $0x78] sm:$0xf]
        %v394 = vld [vmem:[#allocation6 + $0x7c] sm:$0xf]
        %v427 = vunpack.c.l.b16 %v331
        %v428 = vunpack.c.h.b16 %v331
        %v429 = vunpack.c.l.b16 %v332
        %v430 = vunpack.c.h.b16 %v332
        %v431 = vunpack.c.l.b16 %v333
        %v432 = vunpack.c.h.b16 %v333
        %v433 = vunpack.c.l.b16 %v334
        %v434 = vunpack.c.h.b16 %v334
        %v435 = vunpack.c.l.b16 %v335
        %v436 = vunpack.c.h.b16 %v335
        %v437 = vunpack.c.l.b16 %v336
        %v438 = vunpack.c.h.b16 %v336
        %v439 = vunpack.c.l.b16 %v337
        %v440 = vunpack.c.h.b16 %v337
        %v441 = vunpack.c.l.b16 %v338
        %v442 = vunpack.c.h.b16 %v338
        %v443 = vunpack.c.l.b16 %v339
        %v444 = vunpack.c.h.b16 %v339
        %v445 = vunpack.c.l.b16 %v340
        %v446 = vunpack.c.h.b16 %v340
        %v447 = vunpack.c.l.b16 %v341
        %v448 = vunpack.c.h.b16 %v341
        %v449 = vunpack.c.l.b16 %v342
        %v450 = vunpack.c.h.b16 %v342
        %v451 = vunpack.c.l.b16 %v343
        %v452 = vunpack.c.h.b16 %v343
        %v453 = vunpack.c.l.b16 %v344
        %v454 = vunpack.c.h.b16 %v344
        %v455 = vunpack.c.l.b16 %v345
        %v456 = vunpack.c.h.b16 %v345
        %v457 = vunpack.c.l.b16 %v346
        %v458 = vunpack.c.h.b16 %v346
        %v459 = vunpack.c.l.b16 %v347
        %v460 = vunpack.c.h.b16 %v347
        %v461 = vunpack.c.l.b16 %v348
        %v462 = vunpack.c.h.b16 %v348
        %v463 = vunpack.c.l.b16 %v349
        %v464 = vunpack.c.h.b16 %v349
        %v465 = vunpack.c.l.b16 %v350
        %v466 = vunpack.c.h.b16 %v350
        %v467 = vunpack.c.l.b16 %v351
        %v468 = vunpack.c.h.b16 %v351
        %v469 = vunpack.c.l.b16 %v352
        %v470 = vunpack.c.h.b16 %v352
        %v471 = vunpack.c.l.b16 %v353
        %v472 = vunpack.c.h.b16 %v353
        %v473 = vunpack.c.l.b16 %v354
        %v474 = vunpack.c.h.b16 %v354
        %v475 = vunpack.c.l.b16 %v355
        %v476 = vunpack.c.h.b16 %v355
        %v477 = vunpack.c.l.b16 %v356
        %v478 = vunpack.c.h.b16 %v356
        %v479 = vunpack.c.l.b16 %v357
        %v480 = vunpack.c.h.b16 %v357
        %v481 = vunpack.c.l.b16 %v358
        %v482 = vunpack.c.h.b16 %v358
        %v483 = vunpack.c.l.b16 %v359
        %v484 = vunpack.c.h.b16 %v359
        %v485 = vunpack.c.l.b16 %v360
        %v486 = vunpack.c.h.b16 %v360
        %v487 = vunpack.c.l.b16 %v361
        %v488 = vunpack.c.h.b16 %v361
        %v489 = vunpack.c.l.b16 %v362
        %v490 = vunpack.c.h.b16 %v362
        %v491 = vpack.c.b16 %v429, %v427
        %v492 = vpack.c.b16 %v430, %v428
        %v493 = vpack.c.b16 %v433, %v431
        %v494 = vpack.c.b16 %v434, %v432
        %v495 = vpack.c.b16 %v437, %v435
        %v496 = vpack.c.b16 %v438, %v436
        %v497 = vpack.c.b16 %v441, %v439
        %v498 = vpack.c.b16 %v442, %v440
        %v499 = vpack.c.b16 %v445, %v443
        %v500 = vpack.c.b16 %v446, %v444
        %v501 = vpack.c.b16 %v449, %v447
        %v502 = vpack.c.b16 %v450, %v448
        %v503 = vpack.c.b16 %v453, %v451
        %v504 = vpack.c.b16 %v454, %v452
        %v505 = vpack.c.b16 %v457, %v455
        %v506 = vpack.c.b16 %v458, %v456
        %v507 = vpack.c.b16 %v461, %v459
        %v508 = vpack.c.b16 %v462, %v460
        %v509 = vpack.c.b16 %v465, %v463
        %v510 = vpack.c.b16 %v466, %v464
        %v511 = vpack.c.b16 %v469, %v467
        %v512 = vpack.c.b16 %v470, %v468
        %v513 = vpack.c.b16 %v473, %v471
        %v514 = vpack.c.b16 %v474, %v472
        %v515 = vpack.c.b16 %v477, %v475
        %v516 = vpack.c.b16 %v478, %v476
        %v517 = vpack.c.b16 %v481, %v479
        %v518 = vpack.c.b16 %v482, %v480
        %v519 = vpack.c.b16 %v485, %v483
        %v520 = vpack.c.b16 %v486, %v484
        %v521 = vpack.c.b16 %v489, %v487
        %v522 = vpack.c.b16 %v490, %v488
        %v587 = vunpack.c.l.b16 %v363
        %v588 = vunpack.c.l.b16 %v364
        %v589 = vunpack.c.l.b16 %v365
        %v590 = vunpack.c.l.b16 %v366
        %v591 = vunpack.c.l.b16 %v367
        %v592 = vunpack.c.l.b16 %v368
        %v593 = vunpack.c.l.b16 %v369
        %v594 = vunpack.c.l.b16 %v370
        %v595 = vunpack.c.l.b16 %v371
        %v596 = vunpack.c.l.b16 %v372
        %v597 = vunpack.c.l.b16 %v373
        %v598 = vunpack.c.l.b16 %v374
        %v599 = vunpack.c.l.b16 %v375
        %v600 = vunpack.c.l.b16 %v376
        %v601 = vunpack.c.l.b16 %v377
        %v602 = vunpack.c.l.b16 %v378
        %v603 = vunpack.c.l.b16 %v379
        %v604 = vunpack.c.l.b16 %v380
        %v605 = vunpack.c.l.b16 %v381
        %v606 = vunpack.c.l.b16 %v382
        %v607 = vunpack.c.l.b16 %v383
        %v608 = vunpack.c.l.b16 %v384
        %v609 = vunpack.c.l.b16 %v385
        %v610 = vunpack.c.l.b16 %v386
        %v611 = vunpack.c.l.b16 %v387
        %v612 = vunpack.c.l.b16 %v388
        %v613 = vunpack.c.l.b16 %v389
        %v614 = vunpack.c.l.b16 %v390
        %v615 = vunpack.c.l.b16 %v391
        %v616 = vunpack.c.l.b16 %v392
        %v617 = vunpack.c.l.b16 %v393
        %v618 = vunpack.c.l.b16 %v394
        %v619 = vpack.c.b16 %v588, %v587
        %v620 = vpack.c.b16 %v590, %v589
        %v621 = vpack.c.b16 %v592, %v591
        %v622 = vpack.c.b16 %v594, %v593
        %v623 = vpack.c.b16 %v596, %v595
        %v624 = vpack.c.b16 %v598, %v597
        %v625 = vpack.c.b16 %v600, %v599
        %v626 = vpack.c.b16 %v602, %v601
        %v627 = vpack.c.b16 %v604, %v603
        %v628 = vpack.c.b16 %v606, %v605
        %v629 = vpack.c.b16 %v608, %v607
        %v630 = vpack.c.b16 %v610, %v609
        %v631 = vpack.c.b16 %v612, %v611
        %v632 = vpack.c.b16 %v614, %v613
        %v633 = vpack.c.b16 %v616, %v615
        %v634 = vpack.c.b16 %v618, %v617
        %651 = vmatprep.subr.bf16.mxu0 0
        %652 = vmatpush1.bf16.msra.mxu0 %v619
        %653 = vmatprep.subr.bf16.mxu0 0
        %654 = vmatpush1.bf16.msra.mxu0 %v620
        %655 = vmatprep.subr.bf16.mxu0 0
        %656 = vmatpush1.bf16.msra.mxu0 %v621
        %657 = vmatprep.subr.bf16.mxu0 0
        %658 = vmatpush1.bf16.msra.mxu0 %v622
        %659 = vmatprep.subr.bf16.mxu0 0
        %660 = vmatpush1.bf16.msra.mxu0 %v623
        %661 = vmatprep.subr.bf16.mxu0 0
        %662 = vmatpush1.bf16.msra.mxu0 %v624
        %663 = vmatprep.subr.bf16.mxu0 0
        %664 = vmatpush1.bf16.msra.mxu0 %v625
        %665 = vmatprep.subr.bf16.mxu0 0
        %666 = vmatpush1.bf16.msra.mxu0 %v626
        %667 = vmatprep.subr.bf16.mxu0 0
        %668 = vmatpush1.bf16.msra.mxu0 %v627
        %669 = vmatprep.subr.bf16.mxu0 0
        %670 = vmatpush1.bf16.msra.mxu0 %v628
        %671 = vmatprep.subr.bf16.mxu0 0
        %672 = vmatpush1.bf16.msra.mxu0 %v629
        %673 = vmatprep.subr.bf16.mxu0 0
        %674 = vmatpush1.bf16.msra.mxu0 %v630
        %675 = vmatprep.subr.bf16.mxu0 0
        %676 = vmatpush1.bf16.msra.mxu0 %v631
        %677 = vmatprep.subr.bf16.mxu0 0
        %678 = vmatpush1.bf16.msra.mxu0 %v632
        %679 = vmatprep.subr.bf16.mxu0 0
        %680 = vmatpush1.bf16.msra.mxu0 %v633
        %681 = vmatprep.subr.bf16.mxu0 0
        %682 = vmatpush1.bf16.msra.mxu0 %v634
        %683 = vmatprep.mubr.bf16.mxu0 %v492
        %684 = vmatmul.mubr.bf16.gmra.mrb[0].mxu0 %v491
        %v685 = vpop.f32.mrb[0].mxu0
        %v686 = vadd.f32 0.0, %v685
        %v687 = vpop.f32.mrb[0].mxu0
        %v688 = vpop.f32.mrb[0].mxu0
        %v689 = vadd.f32 0.0, %v688
        %v690 = vpop.f32.mrb[0].mxu0
        %691 = vmatprep.mubr.bf16.mxu0 %v494
        %692 = vmatmul.mubr.bf16.gmra.mrb[0].mxu0 %v493
        %v693 = vpop.f32.mrb[0].mxu0
        %v694 = vadd.f32 0.0, %v693
        %v695 = vpop.f32.mrb[0].mxu0
        %v696 = vpop.f32.mrb[0].mxu0
        %v697 = vadd.f32 0.0, %v696
        %v698 = vpop.f32.mrb[0].mxu0
        %699 = vmatprep.mubr.bf16.mxu0 %v496
        %700 = vmatmul.mubr.bf16.gmra.mrb[0].mxu0 %v495
        %v701 = vpop.f32.mrb[0].mxu0
        %v702 = vadd.f32 0.0, %v701
        %v703 = vpop.f32.mrb[0].mxu0
        %v704 = vpop.f32.mrb[0].mxu0
        %v705 = vadd.f32 0.0, %v704
        %v706 = vpop.f32.mrb[0].mxu0
        %707 = vmatprep.mubr.bf16.mxu0 %v498
        %708 = vmatmul.mubr.bf16.gmra.mrb[0].mxu0 %v497
        %v709 = vpop.f32.mrb[0].mxu0
        %v710 = vadd.f32 0.0, %v709
        %v711 = vpop.f32.mrb[0].mxu0
        %v712 = vpop.f32.mrb[0].mxu0
        %v713 = vadd.f32 0.0, %v712
        %v714 = vpop.f32.mrb[0].mxu0
        %715 = vmatprep.mubr.bf16.mxu0 %v500
        %716 = vmatmul.mubr.bf16.gmra.mrb[0].mxu0 %v499
        %v717 = vpop.f32.mrb[0].mxu0
        %v718 = vadd.f32 0.0, %v717
        %v719 = vpop.f32.mrb[0].mxu0
        %v720 = vpop.f32.mrb[0].mxu0
        %v721 = vadd.f32 0.0, %v720
        %v722 = vpop.f32.mrb[0].mxu0
        %723 = vmatprep.mubr.bf16.mxu0 %v502
        %724 = vmatmul.mubr.bf16.gmra.mrb[0].mxu0 %v501
        %v725 = vpop.f32.mrb[0].mxu0
        %v726 = vadd.f32 0.0, %v725
        %v727 = vpop.f32.mrb[0].mxu0
        %v728 = vpop.f32.mrb[0].mxu0
        %v729 = vadd.f32 0.0, %v728
        %v730 = vpop.f32.mrb[0].mxu0
        %731 = vmatprep.mubr.bf16.mxu0 %v504
        %732 = vmatmul.mubr.bf16.gmra.mrb[0].mxu0 %v503
        %v733 = vpop.f32.mrb[0].mxu0
        %v734 = vadd.f32 0.0, %v733
        %v735 = vpop.f32.mrb[0].mxu0
        %v736 = vpop.f32.mrb[0].mxu0
        %v737 = vadd.f32 0.0, %v736
        %v738 = vpop.f32.mrb[0].mxu0
        %739 = vmatprep.mubr.bf16.mxu0 %v506
        %740 = vmatmul.mubr.bf16.gmra.mrb[0].mxu0 %v505
        %v741 = vpop.f32.mrb[0].mxu0
        %v742 = vadd.f32 0.0, %v741
        %v743 = vpop.f32.mrb[0].mxu0
        %v744 = vpop.f32.mrb[0].mxu0
        %v745 = vadd.f32 0.0, %v744
        %v746 = vpop.f32.mrb[0].mxu0
        %747 = vmatprep.mubr.bf16.mxu0 %v508
        %748 = vmatmul.mubr.bf16.gmra.mrb[0].mxu0 %v507
        %v749 = vpop.f32.mrb[0].mxu0
        %v750 = vadd.f32 0.0, %v749
        %v751 = vpop.f32.mrb[0].mxu0
        %v752 = vpop.f32.mrb[0].mxu0
        %v753 = vadd.f32 0.0, %v752
        %v754 = vpop.f32.mrb[0].mxu0
        %755 = vmatprep.mubr.bf16.mxu0 %v510
        %756 = vmatmul.mubr.bf16.gmra.mrb[0].mxu0 %v509
        %v757 = vpop.f32.mrb[0].mxu0
        %v758 = vadd.f32 0.0, %v757
        %v759 = vpop.f32.mrb[0].mxu0
        %v760 = vpop.f32.mrb[0].mxu0
        %v761 = vadd.f32 0.0, %v760
        %v762 = vpop.f32.mrb[0].mxu0
        %763 = vmatprep.mubr.bf16.mxu0 %v512
        %764 = vmatmul.mubr.bf16.gmra.mrb[0].mxu0 %v511
        %v765 = vpop.f32.mrb[0].mxu0
        %v766 = vadd.f32 0.0, %v765
        %v767 = vpop.f32.mrb[0].mxu0
        %v768 = vpop.f32.mrb[0].mxu0
        %v769 = vadd.f32 0.0, %v768
        %v770 = vpop.f32.mrb[0].mxu0
        %771 = vmatprep.mubr.bf16.mxu0 %v514
        %772 = vmatmul.mubr.bf16.gmra.mrb[0].mxu0 %v513
        %v773 = vpop.f32.mrb[0].mxu0
        %v774 = vadd.f32 0.0, %v773
        %v775 = vpop.f32.mrb[0].mxu0
        %v776 = vpop.f32.mrb[0].mxu0
        %v777 = vadd.f32 0.0, %v776
        %v778 = vpop.f32.mrb[0].mxu0
        %779 = vmatprep.mubr.bf16.mxu0 %v516
        %780 = vmatmul.mubr.bf16.gmra.mrb[0].mxu0 %v515
        %v781 = vpop.f32.mrb[0].mxu0
        %v782 = vadd.f32 0.0, %v781
        %v783 = vpop.f32.mrb[0].mxu0
        %v784 = vpop.f32.mrb[0].mxu0
        %v785 = vadd.f32 0.0, %v784
        %v786 = vpop.f32.mrb[0].mxu0
        %787 = vmatprep.mubr.bf16.mxu0 %v518
        %788 = vmatmul.mubr.bf16.gmra.mrb[0].mxu0 %v517
        %v789 = vpop.f32.mrb[0].mxu0
        %v790 = vadd.f32 0.0, %v789
        %v791 = vpop.f32.mrb[0].mxu0
        %v792 = vpop.f32.mrb[0].mxu0
        %v793 = vadd.f32 0.0, %v792
        %v794 = vpop.f32.mrb[0].mxu0
        %795 = vmatprep.mubr.bf16.mxu0 %v520
        %796 = vmatmul.mubr.bf16.gmra.mrb[0].mxu0 %v519
        %v797 = vpop.f32.mrb[0].mxu0
        %v798 = vadd.f32 0.0, %v797
        %v799 = vpop.f32.mrb[0].mxu0
        %v800 = vpop.f32.mrb[0].mxu0
        %v801 = vadd.f32 0.0, %v800
        %v802 = vpop.f32.mrb[0].mxu0
        %803 = vmatprep.mubr.bf16.mxu0 %v522
        %804 = vmatmul.mubr.bf16.gmra.mrb[0].mxu0 %v521
        %v805 = vpop.f32.mrb[0].mxu0
        %v806 = vadd.f32 0.0, %v805
        %v807 = vpop.f32.mrb[0].mxu0
        %v808 = vpop.f32.mrb[0].mxu0
        %v809 = vadd.f32 0.0, %v808
        %v810 = vpop.f32.mrb[0].mxu0
        %811 = vdwg.mxu0
        %v812 = vadd.f32 %v299, %v686
        %v813 = vadd.f32 %v300, %v689
        %v814 = vadd.f32 %v301, %v694
        %v815 = vadd.f32 %v302, %v697
        %v816 = vadd.f32 %v303, %v702
        %v817 = vadd.f32 %v304, %v705
        %v818 = vadd.f32 %v305, %v710
        %v819 = vadd.f32 %v306, %v713
        %v820 = vadd.f32 %v307, %v718
        %v821 = vadd.f32 %v308, %v721
        %v822 = vadd.f32 %v309, %v726
        %v823 = vadd.f32 %v310, %v729
        %v824 = vadd.f32 %v311, %v734
        %v825 = vadd.f32 %v312, %v737
        %v826 = vadd.f32 %v313, %v742
        %v827 = vadd.f32 %v314, %v745
        %v828 = vadd.f32 %v315, %v750
        %v829 = vadd.f32 %v316, %v753
        %v830 = vadd.f32 %v317, %v758
        %v831 = vadd.f32 %v318, %v761
        %v832 = vadd.f32 %v319, %v766
        %v833 = vadd.f32 %v320, %v769
        %v834 = vadd.f32 %v321, %v774
        %v835 = vadd.f32 %v322, %v777
        %v836 = vadd.f32 %v323, %v782
        %v837 = vadd.f32 %v324, %v785
        %v838 = vadd.f32 %v325, %v790
        %v839 = vadd.f32 %v326, %v793
        %v840 = vadd.f32 %v327, %v798
        %v841 = vadd.f32 %v328, %v801
        %v842 = vadd.f32 %v329, %v806
        %v843 = vadd.f32 %v330, %v809
        %844 = vst [vmem:[#allocation2] sm:$0xff] %v812
        %845 = vst [vmem:[#allocation2 + $0x8] sm:$0xff] %v813
        %846 = vst [vmem:[#allocation2 + $0x10] sm:$0xff] %v814
        %847 = vst [vmem:[#allocation2 + $0x18] sm:$0xff] %v815
        %848 = vst [vmem:[#allocation2 + $0x20] sm:$0xff] %v816
        %849 = vst [vmem:[#allocation2 + $0x28] sm:$0xff] %v817
        %850 = vst [vmem:[#allocation2 + $0x30] sm:$0xff] %v818
        %851 = vst [vmem:[#allocation2 + $0x38] sm:$0xff] %v819
        %852 = vst [vmem:[#allocation2 + $0x40] sm:$0xff] %v820
        %853 = vst [vmem:[#allocation2 + $0x48] sm:$0xff] %v821
        %854 = vst [vmem:[#allocation2 + $0x50] sm:$0xff] %v822
        %855 = vst [vmem:[#allocation2 + $0x58] sm:$0xff] %v823
        %856 = vst [vmem:[#allocation2 + $0x60] sm:$0xff] %v824
        %857 = vst [vmem:[#allocation2 + $0x68] sm:$0xff] %v825
        %858 = vst [vmem:[#allocation2 + $0x70] sm:$0xff] %v826
        %859 = vst [vmem:[#allocation2 + $0x78] sm:$0xff] %v827
        %860 = vst [vmem:[#allocation2 + $0x80] sm:$0xff] %v828
        %861 = vst [vmem:[#allocation2 + $0x88] sm:$0xff] %v829
        %862 = vst [vmem:[#allocation2 + $0x90] sm:$0xff] %v830
        %863 = vst [vmem:[#allocation2 + $0x98] sm:$0xff] %v831
        %864 = vst [vmem:[#allocation2 + $0xa0] sm:$0xff] %v832
        %865 = vst [vmem:[#allocation2 + $0xa8] sm:$0xff] %v833
        %866 = vst [vmem:[#allocation2 + $0xb0] sm:$0xff] %v834
        %867 = vst [vmem:[#allocation2 + $0xb8] sm:$0xff] %v835
        %868 = vst [vmem:[#allocation2 + $0xc0] sm:$0xff] %v836
        %869 = vst [vmem:[#allocation2 + $0xc8] sm:$0xff] %v837
        %870 = vst [vmem:[#allocation2 + $0xd0] sm:$0xff] %v838
        %871 = vst [vmem:[#allocation2 + $0xd8] sm:$0xff] %v839
        %872 = vst [vmem:[#allocation2 + $0xe0] sm:$0xff] %v840
        %873 = vst [vmem:[#allocation2 + $0xe8] sm:$0xff] %v841
        %874 = vst [vmem:[#allocation2 + $0xf0] sm:$0xff] %v842
        %875 = vst [vmem:[#allocation2 + $0xf8] sm:$0xff] %v843
        // Predicated region
        $region45: #{_mm_padded.1} parent=31 // pred_check
          %p876 = pneg %p263
        $region46: #{_mm_padded.1} parent=31 // pred_check_branch
          %878 = sbr.rel (%p876) target = $region48
        $region47: #{_mm_padded.1} parent=31 // pred_region
          %v879 = vld [vmem:[%s260] sm:$0x3]
          %v880 = vld [vmem:[#allocation2] sm:$0xff]
          %v881 = vld [vmem:[#allocation2 + $0x8] sm:$0xff]
          %v882 = vld [vmem:[#allocation2 + $0x10] sm:$0xff]
          %v883 = vld [vmem:[#allocation2 + $0x18] sm:$0xff]
          %v884 = vld [vmem:[#allocation2 + $0x20] sm:$0xff]
          %v885 = vld [vmem:[#allocation2 + $0x28] sm:$0xff]
          %v886 = vld [vmem:[#allocation2 + $0x30] sm:$0xff]
          %v887 = vld [vmem:[#allocation2 + $0x38] sm:$0xff]
          %v888 = vld [vmem:[#allocation2 + $0x40] sm:$0xff]
          %v889 = vld [vmem:[#allocation2 + $0x48] sm:$0xff]
          %v890 = vld [vmem:[#allocation2 + $0x50] sm:$0xff]
          %v891 = vld [vmem:[#allocation2 + $0x58] sm:$0xff]
          %v892 = vld [vmem:[#allocation2 + $0x60] sm:$0xff]
          %v893 = vld [vmem:[#allocation2 + $0x68] sm:$0xff]
          %v894 = vld [vmem:[#allocation2 + $0x70] sm:$0xff]
          %v895 = vld [vmem:[#allocation2 + $0x78] sm:$0xff]
          %v896 = vld [vmem:[#allocation2 + $0x80] sm:$0xff]
          %v897 = vld [vmem:[#allocation2 + $0x88] sm:$0xff]
          %v898 = vld [vmem:[#allocation2 + $0x90] sm:$0xff]
          %v899 = vld [vmem:[#allocation2 + $0x98] sm:$0xff]
          %v900 = vld [vmem:[#allocation2 + $0xa0] sm:$0xff]
          %v901 = vld [vmem:[#allocation2 + $0xa8] sm:$0xff]
          %v902 = vld [vmem:[#allocation2 + $0xb0] sm:$0xff]
          %v903 = vld [vmem:[#allocation2 + $0xb8] sm:$0xff]
          %v904 = vld [vmem:[#allocation2 + $0xc0] sm:$0xff]
          %v905 = vld [vmem:[#allocation2 + $0xc8] sm:$0xff]
          %v906 = vld [vmem:[#allocation2 + $0xd0] sm:$0xff]
          %v907 = vld [vmem:[#allocation2 + $0xd8] sm:$0xff]
          %v908 = vld [vmem:[#allocation2 + $0xe0] sm:$0xff]
          %v909 = vld [vmem:[#allocation2 + $0xe8] sm:$0xff]
          %v910 = vld [vmem:[#allocation2 + $0xf0] sm:$0xff]
          %v911 = vld [vmem:[#allocation2 + $0xf8] sm:$0xff]
          %v912 = vlaneseq
          %v913 = vshrl.u32 %v912, 7
          %v914 = vsub.s32 0, %v913
          %v915 = vrot.slane %v879, %v914
          %v916 = vmul.f32 %v880, %v915
          %v917 = vmul.f32 %v881, %v915
          %v918 = vmul.f32 %v882, %v915
          %v919 = vmul.f32 %v883, %v915
          %v920 = vmul.f32 %v884, %v915
          %v921 = vmul.f32 %v885, %v915
          %v922 = vmul.f32 %v886, %v915
          %v923 = vmul.f32 %v887, %v915
          %v924 = vmul.f32 %v888, %v915
          %v925 = vmul.f32 %v889, %v915
          %v926 = vmul.f32 %v890, %v915
          %v927 = vmul.f32 %v891, %v915
          %v928 = vmul.f32 %v892, %v915
          %v929 = vmul.f32 %v893, %v915
          %v930 = vmul.f32 %v894, %v915
          %v931 = vmul.f32 %v895, %v915
          %v932 = vmul.f32 %v896, %v915
          %v933 = vmul.f32 %v897, %v915
          %v934 = vmul.f32 %v898, %v915
          %v935 = vmul.f32 %v899, %v915
          %v936 = vmul.f32 %v900, %v915
          %v937 = vmul.f32 %v901, %v915
          %v938 = vmul.f32 %v902, %v915
          %v939 = vmul.f32 %v903, %v915
          %v940 = vmul.f32 %v904, %v915
          %v941 = vmul.f32 %v905, %v915
          %v942 = vmul.f32 %v906, %v915
          %v943 = vmul.f32 %v907, %v915
          %v944 = vmul.f32 %v908, %v915
          %v945 = vmul.f32 %v909, %v915
          %v946 = vmul.f32 %v910, %v915
          %v947 = vmul.f32 %v911, %v915
          %v948 = vlaneseq
          %v949 = vshrl.u32 %v948, 7
          %v950 = vsub.s32 1, %v949
          %v951 = vrot.slane %v879, %v950
          %v952 = vadd.f32 %v916, %v951
          %v953 = vadd.f32 %v917, %v951
          %v954 = vadd.f32 %v918, %v951
          %v955 = vadd.f32 %v919, %v951
          %v956 = vadd.f32 %v920, %v951
          %v957 = vadd.f32 %v921, %v951
          %v958 = vadd.f32 %v922, %v951
          %v959 = vadd.f32 %v923, %v951
          %v960 = vadd.f32 %v924, %v951
          %v961 = vadd.f32 %v925, %v951
          %v962 = vadd.f32 %v926, %v951
          %v963 = vadd.f32 %v927, %v951
          %v964 = vadd.f32 %v928, %v951
          %v965 = vadd.f32 %v929, %v951
          %v966 = vadd.f32 %v930, %v951
          %v967 = vadd.f32 %v931, %v951
          %v968 = vadd.f32 %v932, %v951
          %v969 = vadd.f32 %v933, %v951
          %v970 = vadd.f32 %v934, %v951
          %v971 = vadd.f32 %v935, %v951
          %v972 = vadd.f32 %v936, %v951
          %v973 = vadd.f32 %v937, %v951
          %v974 = vadd.f32 %v938, %v951
          %v975 = vadd.f32 %v939, %v951
          %v976 = vadd.f32 %v940, %v951
          %v977 = vadd.f32 %v941, %v951
          %v978 = vadd.f32 %v942, %v951
          %v979 = vadd.f32 %v943, %v951
          %v980 = vadd.f32 %v944, %v951
          %v981 = vadd.f32 %v945, %v951
          %v982 = vadd.f32 %v946, %v951
          %v983 = vadd.f32 %v947, %v951
          %v984 = vmax.f32 %v952, 0.0
          %v985 = vmax.f32 %v953, 0.0
          %v986 = vmax.f32 %v954, 0.0
          %v987 = vmax.f32 %v955, 0.0
          %v988 = vmax.f32 %v956, 0.0
          %v989 = vmax.f32 %v957, 0.0
          %v990 = vmax.f32 %v958, 0.0
          %v991 = vmax.f32 %v959, 0.0
          %v992 = vmax.f32 %v960, 0.0
          %v993 = vmax.f32 %v961, 0.0
          %v994 = vmax.f32 %v962, 0.0
          %v995 = vmax.f32 %v963, 0.0
          %v996 = vmax.f32 %v964, 0.0
          %v997 = vmax.f32 %v965, 0.0
          %v998 = vmax.f32 %v966, 0.0
          %v999 = vmax.f32 %v967, 0.0
          %v1000 = vmax.f32 %v968, 0.0
          %v1001 = vmax.f32 %v969, 0.0
          %v1002 = vmax.f32 %v970, 0.0
          %v1003 = vmax.f32 %v971, 0.0
          %v1004 = vmax.f32 %v972, 0.0
          %v1005 = vmax.f32 %v973, 0.0
          %v1006 = vmax.f32 %v974, 0.0
          %v1007 = vmax.f32 %v975, 0.0
          %v1008 = vmax.f32 %v976, 0.0
          %v1009 = vmax.f32 %v977, 0.0
          %v1010 = vmax.f32 %v978, 0.0
          %v1011 = vmax.f32 %v979, 0.0
          %v1012 = vmax.f32 %v980, 0.0
          %v1013 = vmax.f32 %v981, 0.0
          %v1014 = vmax.f32 %v982, 0.0
          %v1015 = vmax.f32 %v983, 0.0
          %v1016 = vpack.c.bf16 %v985, %v984
          %v1017 = vpack.c.bf16 %v987, %v986
          %v1018 = vpack.c.bf16 %v989, %v988
          %v1019 = vpack.c.bf16 %v991, %v990
          %v1020 = vpack.c.bf16 %v993, %v992
          %v1021 = vpack.c.bf16 %v995, %v994
          %v1022 = vpack.c.bf16 %v997, %v996
          %v1023 = vpack.c.bf16 %v999, %v998
          %v1024 = vpack.c.bf16 %v1001, %v1000
          %v1025 = vpack.c.bf16 %v1003, %v1002
          %v1026 = vpack.c.bf16 %v1005, %v1004
          %v1027 = vpack.c.bf16 %v1007, %v1006
          %v1028 = vpack.c.bf16 %v1009, %v1008
          %v1029 = vpack.c.bf16 %v1011, %v1010
          %v1030 = vpack.c.bf16 %v1013, %v1012
          %v1031 = vpack.c.bf16 %v1015, %v1014
          %v1048 = vunpack.c.l.b16 %v1016
          %v1049 = vunpack.c.h.b16 %v1016
          %v1050 = vunpack.c.l.b16 %v1017
          %v1051 = vunpack.c.h.b16 %v1017
          %v1052 = vunpack.c.l.b16 %v1018
          %v1053 = vunpack.c.h.b16 %v1018
          %v1054 = vunpack.c.l.b16 %v1019
          %v1055 = vunpack.c.h.b16 %v1019
          %v1056 = vunpack.c.l.b16 %v1020
          %v1057 = vunpack.c.h.b16 %v1020
          %v1058 = vunpack.c.l.b16 %v1021
          %v1059 = vunpack.c.h.b16 %v1021
          %v1060 = vunpack.c.l.b16 %v1022
          %v1061 = vunpack.c.h.b16 %v1022
          %v1062 = vunpack.c.l.b16 %v1023
          %v1063 = vunpack.c.h.b16 %v1023
          %v1064 = vunpack.c.l.b16 %v1024
          %v1065 = vunpack.c.h.b16 %v1024
          %v1066 = vunpack.c.l.b16 %v1025
          %v1067 = vunpack.c.h.b16 %v1025
          %v1068 = vunpack.c.l.b16 %v1026
          %v1069 = vunpack.c.h.b16 %v1026
          %v1070 = vunpack.c.l.b16 %v1027
          %v1071 = vunpack.c.h.b16 %v1027
          %v1072 = vunpack.c.l.b16 %v1028
          %v1073 = vunpack.c.h.b16 %v1028
          %v1074 = vunpack.c.l.b16 %v1029
          %v1075 = vunpack.c.h.b16 %v1029
          %v1076 = vunpack.c.l.b16 %v1030
          %v1077 = vunpack.c.h.b16 %v1030
          %v1078 = vunpack.c.l.b16 %v1031
          %v1079 = vunpack.c.h.b16 %v1031
          %v1080 = vpack.c.b16 %v1048, %v1048
          %v1081 = vpack.c.b16 %v1049, %v1049
          %v1082 = vpack.c.b16 %v1050, %v1050
          %v1083 = vpack.c.b16 %v1051, %v1051
          %v1084 = vpack.c.b16 %v1052, %v1052
          %v1085 = vpack.c.b16 %v1053, %v1053
          %v1086 = vpack.c.b16 %v1054, %v1054
          %v1087 = vpack.c.b16 %v1055, %v1055
          %v1088 = vpack.c.b16 %v1056, %v1056
          %v1089 = vpack.c.b16 %v1057, %v1057
          %v1090 = vpack.c.b16 %v1058, %v1058
          %v1091 = vpack.c.b16 %v1059, %v1059
          %v1092 = vpack.c.b16 %v1060, %v1060
          %v1093 = vpack.c.b16 %v1061, %v1061
          %v1094 = vpack.c.b16 %v1062, %v1062
          %v1095 = vpack.c.b16 %v1063, %v1063
          %v1096 = vpack.c.b16 %v1064, %v1064
          %v1097 = vpack.c.b16 %v1065, %v1065
          %v1098 = vpack.c.b16 %v1066, %v1066
          %v1099 = vpack.c.b16 %v1067, %v1067
          %v1100 = vpack.c.b16 %v1068, %v1068
          %v1101 = vpack.c.b16 %v1069, %v1069
          %v1102 = vpack.c.b16 %v1070, %v1070
          %v1103 = vpack.c.b16 %v1071, %v1071
          %v1104 = vpack.c.b16 %v1072, %v1072
          %v1105 = vpack.c.b16 %v1073, %v1073
          %v1106 = vpack.c.b16 %v1074, %v1074
          %v1107 = vpack.c.b16 %v1075, %v1075
          %v1108 = vpack.c.b16 %v1076, %v1076
          %v1109 = vpack.c.b16 %v1077, %v1077
          %v1110 = vpack.c.b16 %v1078, %v1078
          %v1111 = vpack.c.b16 %v1079, %v1079
          %1144 = vst [vmem:[%s253] sm:$0xf] %v1080
          %1145 = vst [vmem:[%s253 + $0x4] sm:$0xf] %v1081
          %1146 = vst [vmem:[%s253 + $0x8] sm:$0xf] %v1082
          %1147 = vst [vmem:[%s253 + $0xc] sm:$0xf] %v1083
          %1148 = vst [vmem:[%s253 + $0x10] sm:$0xf] %v1084
          %1149 = vst [vmem:[%s253 + $0x14] sm:$0xf] %v1085
          %1150 = vst [vmem:[%s253 + $0x18] sm:$0xf] %v1086
          %1151 = vst [vmem:[%s253 + $0x1c] sm:$0xf] %v1087
          %1152 = vst [vmem:[%s253 + $0x20] sm:$0xf] %v1088
          %1153 = vst [vmem:[%s253 + $0x24] sm:$0xf] %v1089
          %1154 = vst [vmem:[%s253 + $0x28] sm:$0xf] %v1090
          %1155 = vst [vmem:[%s253 + $0x2c] sm:$0xf] %v1091
          %1156 = vst [vmem:[%s253 + $0x30] sm:$0xf] %v1092
          %1157 = vst [vmem:[%s253 + $0x34] sm:$0xf] %v1093
          %1158 = vst [vmem:[%s253 + $0x38] sm:$0xf] %v1094
          %1159 = vst [vmem:[%s253 + $0x3c] sm:$0xf] %v1095
          %1160 = vst [vmem:[%s253 + $0x40] sm:$0xf] %v1096
          %1161 = vst [vmem:[%s253 + $0x44] sm:$0xf] %v1097
          %1162 = vst [vmem:[%s253 + $0x48] sm:$0xf] %v1098
          %1163 = vst [vmem:[%s253 + $0x4c] sm:$0xf] %v1099
          %1164 = vst [vmem:[%s253 + $0x50] sm:$0xf] %v1100
          %1165 = vst [vmem:[%s253 + $0x54] sm:$0xf] %v1101
          %1166 = vst [vmem:[%s253 + $0x58] sm:$0xf] %v1102
          %1167 = vst [vmem:[%s253 + $0x5c] sm:$0xf] %v1103
          %1168 = vst [vmem:[%s253 + $0x60] sm:$0xf] %v1104
          %1169 = vst [vmem:[%s253 + $0x64] sm:$0xf] %v1105
          %1170 = vst [vmem:[%s253 + $0x68] sm:$0xf] %v1106
          %1171 = vst [vmem:[%s253 + $0x6c] sm:$0xf] %v1107
          %1172 = vst [vmem:[%s253 + $0x70] sm:$0xf] %v1108
          %1173 = vst [vmem:[%s253 + $0x74] sm:$0xf] %v1109
          %1174 = vst [vmem:[%s253 + $0x78] sm:$0xf] %v1110
          %1175 = vst [vmem:[%s253 + $0x7c] sm:$0xf] %v1111
        $region48: #{_mm_padded.1} parent=31 // pred_fallthru
          _
        %s1176 = sand.u32 %s132, 1
        %s1177 = scalar_lea.sflag [#allocation5], %s1176
        %s1178 = sand.u32 %s132, 1
        %s1179 = smul.addr %s1178, 128
        %s1180 = scalar_lea.vmem [#allocation8], %s1179
        // Predicated region
        $region49: #{_mm_padded.1} parent=31 // pred_check
          %p1181 = pneg %p142
        $region50: #{_mm_padded.1} parent=31 // pred_check_branch
          %1183 = sbr.rel (%p1181) target = $region52
        $region51: #{_mm_padded.1} parent=31 // pred_region
          %s1184 = smul.u32 32, %s26
          %s1186 = ssub.s32 2048, 2048
          %1187 = vsyncadd %s1177, %s1186
          %s1188 = sadd.s32 %s27, %s1184
          %s1189 = smul.addr %s1188, 64
          %s1190 = scalar_lea.hbm %s3, %s1189
          %s1191 = sshll.u32 %s1180, 4
          %s1192 = int_to_ptr.vmem [resolvable:$true] %s1191
          %1197 = dma.vmem_to_hbm [thread:$0]  %s1192, 2048, %s1190, %s1177, 64, 64, 4
        $region52: #{_mm_padded.1} parent=31 // pred_fallthru
          _
      $region32: #{_mm_padded.1} parent=5 // pred_fallthru
        _
      %p1198 = scmp.le.s32.totalorder 2, %s16
      // Predicated region
      $region53: #{_mm_padded.1} parent=5 // pred_check
        %p1199 = pneg %p1198
      $region54: #{_mm_padded.1} parent=5 // pred_check_branch
        %1201 = sbr.rel (%p1199) target = $region56
      $region55: #{_mm_padded.1} parent=5 // pred_region
        %s1202 = ssub.s32 %s16, 2
        // Predicated region
        $region57: #{_mm_padded.1} parent=55 // pred_check
          %p1203 = pneg %p148
        $region58: #{_mm_padded.1} parent=55 // pred_check_branch
          %1205 = sbr.rel (%p1203) target = $region60
        $region59: #{_mm_padded.1} parent=55 // pred_region
          %s1206 = sand.u32 %s133, 1
          %s1207 = scalar_lea.sflag [#allocation5], %s1206
          %s1208 = sand.u32 %s133, 1
          %s1209 = smul.addr %s1208, 128
          %s1210 = scalar_lea.vmem [#allocation8], %s1209
          %1211 = dma.done %s1207, 2048
        $region60: #{_mm_padded.1} parent=55 // pred_fallthru
          _
      $region56: #{_mm_padded.1} parent=5 // pred_fallthru
        _
    $region6: #{_mm_padded.1} parent=1 // loop_footer
      %s20 = sadd.s32 1, %s16
    $region7: #{_mm_padded.1} parent=1 // loop_footer_branch
      %15 = sbr.rel target = $region3
    $region8: #{_mm_padded.1} parent=1 // loop_exit
      _
    %1212 = vsyncpa [#allocation4], 1
    %s1213 = scalar_lea.sflag [#allocation4], 1
    %1214 = vsyncpa %s1213, 1
    %1215 = vsyncpa [#allocation7], 1
    %1216 = vsyncpa [#allocation5], 1
    %s1217 = scalar_lea.sflag [#allocation5], 1
    %1218 = vsyncpa %s1217, 1

</llo_original>
